<compile_context>
chip_gen: v7x
topology: tpu7x:2x2x1
jax: 0.10.0
libtpu: 0.0.40
codegen_flags: <defaults>
</compile_context>

<pallas_src>
import math
from functools import partial

import jax
import jax.numpy as jnp
from jax.experimental import pallas as pl
from jax.experimental.pallas import tpu as pltpu


# ------------------------------------------------------------------------
# Kernel: out = where(|w| >= thr, w, xavier_uniform(hash(idx, seed)))
#         mask = |w| >= thr   (int8)
# ------------------------------------------------------------------------
def _mask_apply_kernel(seed_ref, scal_ref, w_ref, out_ref, mask_ref):
    """seed_ref: SMEM (1,) int32 ; scal_ref: SMEM (2,) f32 = [threshold, xavier_bound].

    w_ref/out_ref: (TR, TC) weight tile ; mask_ref: (TR, TC) int8 tile.
    Edge tiles may be partial; out-of-bounds lanes are masked on writeback.
    """
    i = pl.program_id(0)
    j = pl.program_id(1)
    tr, tc = w_ref.shape

    # Global element coordinates of this tile (counter-based RNG => every
    # element draws an independent value regardless of tiling).
    row_ids = jax.lax.broadcasted_iota(jnp.int32, (tr, tc), 0) + i * tr
    col_ids = jax.lax.broadcasted_iota(jnp.int32, (tr, tc), 1) + j * tc

    seed_u = seed_ref[0].astype(jnp.uint32)
    x = (row_ids.astype(jnp.uint32) * jnp.uint32(0x9E3779B1)
         + col_ids.astype(jnp.uint32) * jnp.uint32(0x85EBCA77)
         + seed_u)
    # murmur3-style integer finalizer (good avalanche, pure VPU ops).
    x = x ^ (x >> 16)
    x = x * jnp.uint32(0x7FEB352D)
    x = x ^ (x >> 15)
    x = x * jnp.uint32(0x846CA68B)
    x = x ^ (x >> 16)

    # top 24 bits -> uniform in [0, 1)
    u01 = (x >> 8).astype(jnp.int32).astype(jnp.float32) * (1.0 / (1 << 24))

    thr = scal_ref[0]
    bound = scal_ref[1]
    reinit = u01 * (2.0 * bound) - bound            # Xavier-uniform in [-bound, bound)

    w = w_ref[...]
    keep = jnp.abs(w) >= thr                        # global threshold (hoisted)

    out_ref[...] = jnp.where(keep, w, reinit.astype(w.dtype))
    mask_ref[...] = keep.astype(mask_ref.dtype)


def _round_up(x: int, m: int) -> int:
    return ((x + m - 1) // m) * m


def apply_magnitude_mask(w2d: jax.Array, threshold, xavier_bound, seed: int = 42,
                         tile_r: int = 1024, tile_c: int = 1024):
    """Run the Pallas mask-apply kernel on a 2D weight slab (R, C).

    No padding / slicing: partial edge blocks are handled by Pallas.
    Returns (masked_w2d, mask2d_int8) with the original (R, C) shape.
    """
    R, C = w2d.shape
    dtype = w2d.dtype

    # Lane-dense block shape: last dim multiple of 128, second-last multiple of 8.
    tr = min(tile_r, _round_up(R, 8))
    tc = min(tile_c, _round_up(C, 128))
    grid = (pl.cdiv(R, tr), pl.cdiv(C, tc))

    seed_arr = jnp.array([seed], dtype=jnp.int32)
    scal_arr = jnp.stack([jnp.asarray(threshold, jnp.float32),
                          jnp.asarray(xavier_bound, jnp.float32)])

    out, mask = pl.pallas_call(
        _mask_apply_kernel,
        out_shape=(
            jax.ShapeDtypeStruct((R, C), dtype),
            jax.ShapeDtypeStruct((R, C), jnp.int8),
        ),
        grid_spec=pltpu.PrefetchScalarGridSpec(
            num_scalar_prefetch=2,
            grid=grid,
            in_specs=[
                pl.BlockSpec((tr, tc), lambda i, j, seed, scal: (i, j)),
            ],
            out_specs=(
                pl.BlockSpec((tr, tc), lambda i, j, seed, scal: (i, j)),
                pl.BlockSpec((tr, tc), lambda i, j, seed, scal: (i, j)),
            ),
        ),
        compiler_params=pltpu.CompilerParams(
            dimension_semantics=("parallel", "parallel"),
            vmem_limit_bytes=40 << 20,
        ),
    )(seed_arr, scal_arr, w2d)

    return out, mask


def _lane_dense_view(conv_w: jax.Array) -> jax.Array:
    """Free (contiguous) reshape to a lane-dense 2D slab when possible."""
    n = conv_w.size
    for c in (2048, 1024, 512, 256, 128):
        if n % c == 0:
            return conv_w.reshape(n // c, c)
    # Fallback: natural (O, fan_in) view; edge tiles are partial (masked stores).
    o = conv_w.shape[0]
    return conv_w.reshape(o, n // o)


@partial(jax.jit, static_argnames=("seed", "tile_r", "tile_c"))
def _create_conv_mask(conv_w, seed: int = 42, tile_r: int = 1024, tile_c: int = 1024):
    """Threshold + kernel + reshape back, fused into one dispatch."""
    O, I, KH, KW = conv_w.shape
    fan_in = I * KH * KW
    fan_out = O * KH * KW
    xavier_bound = math.sqrt(6.0 / (fan_in + fan_out))

    w2d = _lane_dense_view(conv_w)

    # Global threshold hoisted out of the kernel (tiny XLA reduction) and
    # passed via SMEM scalar prefetch.
    threshold = jnp.mean(jnp.abs(w2d.astype(jnp.float32)))

    masked_w2d, mask2d = apply_magnitude_mask(
        w2d, threshold, xavier_bound, seed=seed, tile_r=tile_r, tile_c=tile_c)

    return masked_w2d.reshape(conv_w.shape), mask2d.reshape(conv_w.shape)


class AbstractMaskPallas:
    """Mirrors AbstractMask: forward -> create_mask -> masked backbone params."""

    def __init__(self, args=None, device=None):
        self.args = args
        self.device = device

    def forward(self, backbone_params, dataset=None):
        # `.to(self.device)` in torch is device placement; JAX arrays already
        # live on the default (TPU) device.
        return self.create_mask(backbone_params, dataset)

    def create_mask(self, backbone_params, dataset=None):
        # TODO(synk): create_mask is @abstractmethod in the reference; realized
        # here as a magnitude-based mask (keep |w| >= mean(|w|)) with Xavier
        # re-init of the masked-out entries, which is the kernel hot path.
        conv_w = backbone_params["conv_w"]          # OIHW
        fc_w = backbone_params["fc_w"]              # (out_features, in_features)

        masked_conv, conv_mask = _create_conv_mask(conv_w)

        new_params = dict(backbone_params)
        new_params["conv_w"] = masked_conv
        new_params["conv_mask"] = conv_mask
        # Final Linear layer is never masked: pass through unchanged.
        new_params["fc_w"] = fc_w
        return new_params


if __name__ == "__main__":
    key = jax.random.PRNGKey(0)
    k_conv, k_fc = jax.random.split(key)

    # Small synthetic "backbone": one conv layer (OIHW) + final linear layer.
    conv_w = jax.random.normal(k_conv, (8, 4, 3, 3), dtype=jnp.float32) * 0.1
    fc_w = jax.random.normal(k_fc, (10, 32), dtype=jnp.float32) * 0.1
    backbone = {"conv_w": conv_w, "fc_w": fc_w}

    masker = AbstractMaskPallas(args=None, device=None)
    out = masker.forward(backbone)
    jax.block_until_ready(out["conv_w"])
    jax.block_until_ready(out["conv_mask"])
    jax.block_until_ready(out["fc_w"])

    # --- Sanity checks against the same mask rule in pure JAX ------------
    O, I, KH, KW = conv_w.shape
    w2d = conv_w.reshape(O, I * KH * KW)
    thr = jnp.mean(jnp.abs(w2d))
    keep_ref = jnp.abs(w2d) >= thr
    bound = math.sqrt(6.0 / (I * KH * KW + O * KH * KW))

    mask_out = out["conv_mask"].reshape(O, I * KH * KW).astype(bool)
    w_out = out["conv_w"].reshape(O, I * KH * KW)

    assert jnp.array_equal(mask_out, keep_ref), "mask mismatch"
    # kept entries are untouched
    assert jnp.allclose(jnp.where(keep_ref, w_out, 0.0),
                        jnp.where(keep_ref, w2d, 0.0), atol=1e-6)
    # masked-out entries are Xavier re-initialized: within [-bound, bound]
    assert bool(jnp.all(jnp.abs(jnp.where(keep_ref, 0.0, w_out)) <= bound + 1e-6))
    # final linear layer is never masked
    assert jnp.array_equal(out["fc_w"], fc_w)

    print("KERNEL_OK")
</pallas_src>

<mosaic_0001>
module attributes {stable_mosaic.version = 11 : i64} {
  func.func @_mask_apply_kernel(%arg0: i32, %arg1: i32, %arg2: memref<1xi32, #tpu.memory_space<smem>>, %arg3: memref<2xf32, #tpu.memory_space<smem>>, %arg4: memref<8x128xf32, #tpu.memory_space<vmem>>, %arg5: memref<8x128xf32, #tpu.memory_space<vmem>>, %arg6: memref<8x128xi8, #tpu.memory_space<vmem>>) attributes {dimension_semantics = [#tpu.dimension_semantics<parallel>, #tpu.dimension_semantics<parallel>], iteration_bounds = array<i64: 1, 1>, scalar_prefetch = 2 : i64, scratch_operands = 0 : i64, tpu.core_type = #tpu.core_type<tc>, window_params = [{transform_indices = @transform_0, window_bounds = array<i64: 8, 128>}, {transform_indices = @transform_1, window_bounds = array<i64: 8, 128>}, {transform_indices = @transform_2, window_bounds = array<i64: 8, 128>}]} {
    %0 = tpu.iota {dimensions = array<i32: 0>} : vector<8x128xi32>
    %c8_i32 = arith.constant 8 : i32
    %1 = arith.muli %arg0, %c8_i32 : i32
    %2 = vector.broadcast %1 : i32 to vector<8x128xi32>
    %3 = arith.addi %0, %2 : vector<8x128xi32>
    %4 = tpu.iota {dimensions = array<i32: 1>} : vector<8x128xi32>
    %c128_i32 = arith.constant 128 : i32
    %5 = arith.muli %arg1, %c128_i32 : i32
    %6 = vector.broadcast %5 : i32 to vector<8x128xi32>
    %7 = arith.addi %4, %6 : vector<8x128xi32>
    %c0 = arith.constant 0 : index
    %8 = memref.load %arg2[%c0] : memref<1xi32, #tpu.memory_space<smem>>
    %c-1640531535_i32 = arith.constant -1640531535 : i32
    %9 = vector.broadcast %c-1640531535_i32 : i32 to vector<8x128xi32>
    %10 = arith.muli %3, %9 : vector<8x128xi32>
    %c-2048144777_i32 = arith.constant -2048144777 : i32
    %11 = vector.broadcast %c-2048144777_i32 : i32 to vector<8x128xi32>
    %12 = arith.muli %7, %11 : vector<8x128xi32>
    %13 = arith.addi %10, %12 : vector<8x128xi32>
    %14 = vector.broadcast %8 : i32 to vector<8x128xi32>
    %15 = arith.addi %13, %14 : vector<8x128xi32>
    %c16_i32 = arith.constant 16 : i32
    %16 = vector.broadcast %c16_i32 : i32 to vector<8x128xi32>
    %17 = arith.shrui %15, %16 : vector<8x128xi32>
    %18 = arith.xori %15, %17 : vector<8x128xi32>
    %c2146121005_i32 = arith.constant 2146121005 : i32
    %19 = vector.broadcast %c2146121005_i32 : i32 to vector<8x128xi32>
    %20 = arith.muli %18, %19 : vector<8x128xi32>
    %c15_i32 = arith.constant 15 : i32
    %21 = vector.broadcast %c15_i32 : i32 to vector<8x128xi32>
    %22 = arith.shrui %20, %21 : vector<8x128xi32>
    %23 = arith.xori %20, %22 : vector<8x128xi32>
    %c-2073254261_i32 = arith.constant -2073254261 : i32
    %24 = vector.broadcast %c-2073254261_i32 : i32 to vector<8x128xi32>
    %25 = arith.muli %23, %24 : vector<8x128xi32>
    %c16_i32_0 = arith.constant 16 : i32
    %26 = vector.broadcast %c16_i32_0 : i32 to vector<8x128xi32>
    %27 = arith.shrui %25, %26 : vector<8x128xi32>
    %28 = arith.xori %25, %27 : vector<8x128xi32>
    %c8_i32_1 = arith.constant 8 : i32
    %29 = vector.broadcast %c8_i32_1 : i32 to vector<8x128xi32>
    %30 = arith.shrui %28, %29 : vector<8x128xi32>
    %31 = arith.sitofp %30 : vector<8x128xi32> to vector<8x128xf32>
    %cst = arith.constant 5.96046448E-8 : f32
    %32 = vector.broadcast %cst : f32 to vector<8x128xf32>
    %33 = arith.mulf %31, %32 : vector<8x128xf32>
    %c0_2 = arith.constant 0 : index
    %34 = memref.load %arg3[%c0_2] : memref<2xf32, #tpu.memory_space<smem>>
    %c1 = arith.constant 1 : index
    %35 = memref.load %arg3[%c1] : memref<2xf32, #tpu.memory_space<smem>>
    %cst_3 = arith.constant 2.000000e+00 : f32
    %36 = arith.mulf %cst_3, %35 : f32
    %37 = vector.broadcast %36 : f32 to vector<8x128xf32>
    %38 = arith.mulf %33, %37 : vector<8x128xf32>
    %39 = vector.broadcast %35 : f32 to vector<8x128xf32>
    %40 = arith.subf %38, %39 : vector<8x128xf32>
    %c0_4 = arith.constant 0 : index
    %c0_5 = arith.constant 0 : index
    %41 = vector.load %arg4[%c0_4, %c0_5] : memref<8x128xf32, #tpu.memory_space<vmem>>, vector<8x128xf32>
    %42 = math.absf %41 : vector<8x128xf32>
    %43 = vector.broadcast %34 : f32 to vector<8x128xf32>
    %44 = arith.cmpf oge, %42, %43 : vector<8x128xf32>
    %45 = arith.select %44, %41, %40 : vector<8x128xi1>, vector<8x128xf32>
    %c0_6 = arith.constant 0 : index
    %c0_7 = arith.constant 0 : index
    %46 = vector.load %arg5[%c0_6, %c0_7] : memref<8x128xf32, #tpu.memory_space<vmem>>, vector<8x128xf32>
    tpu.vector_store %arg5[%c0_6, %c0_7], %45 {strides = array<i32>} : memref<8x128xf32, #tpu.memory_space<vmem>>, vector<8x128xf32>,
    %47 = arith.extui %44 : vector<8x128xi1> to vector<8x128xi8>
    %c0_8 = arith.constant 0 : index
    %c0_9 = arith.constant 0 : index
    %48 = vector.load %arg6[%c0_8, %c0_9] : memref<8x128xi8, #tpu.memory_space<vmem>>, vector<8x128xi8>
    tpu.vector_store %arg6[%c0_8, %c0_9], %47 {strides = array<i32>} : memref<8x128xi8, #tpu.memory_space<vmem>>, vector<8x128xi8>,
    return
  }
  func.func @transform_0(%arg0: i32, %arg1: i32, %arg2: memref<1xi32, #tpu.memory_space<smem>>, %arg3: memref<2xf32, #tpu.memory_space<smem>>) -> (i32, i32) {
    %c0_i32 = arith.constant 0 : i32
    return %arg0, %arg1 : i32, i32
  }
  func.func @transform_1(%arg0: i32, %arg1: i32, %arg2: memref<1xi32, #tpu.memory_space<smem>>, %arg3: memref<2xf32, #tpu.memory_space<smem>>) -> (i32, i32) {
    %c0_i32 = arith.constant 0 : i32
    return %arg0, %arg1 : i32, i32
  }
  func.func @transform_2(%arg0: i32, %arg1: i32, %arg2: memref<1xi32, #tpu.memory_space<smem>>, %arg3: memref<2xf32, #tpu.memory_space<smem>>) -> (i32, i32) {
    %c0_i32 = arith.constant 0 : i32
    return %arg0, %arg1 : i32, i32
  }
}

</mosaic_0001>

<llo_original>
// kernel: _create_conv_mask.1
$region0: #{_create_conv_mask.1}
  #allocation0 [shape = 'u32[]', space=smem, size = 0x4, offset = 0x4, fixed_abs, tag = 'smem constant byte address 0x4 - core index']
  #allocation1 [shape = 'u32[144,128]{1,0:T(1,128)}', space=vmem, size = 0x12000, scoped, tag = 'internal scratch']
  #allocation2 [shape = 's32[1]{0}', space=sflag, size = 0x4, scoped, tag = 'scoped memory for _create_conv_mask.1']
  #allocation3 [shape = 's32[1]{0:T(128)S(6)}', space=smem, size = 0x200, scoped, tag = 'prefetched SMEM operand 0']
  #allocation4 [shape = 'u8[512]{0}', space=smem, size = 0x200, scoped, tag = 'prefetched SMEM operand 1']
  %s0 = inlined_call_operand.<no memory space> [shape: s32[1], index: 0, kind: input, shape index: {}]
  %s1 = inlined_call_operand.vmem [shape: f32[2], index: 1, kind: input, shape index: {}]
  %s2 = inlined_call_operand.vmem [shape: f32[8,36], index: 2, kind: input, shape index: {}]
  %s3 = inlined_call_operand.vmem [shape: f32[8,36], index: 3, kind: output, shape index: {0}]
  %s4 = inlined_call_operand.vmem [shape: s8[8,36], index: 4, kind: output, shape index: {1}]
  %5 = xla_tuple %s3, %s4
  %s6 = sld [smem:[#allocation0]]
  $region22: #{_create_conv_mask.1} parent=0
    _
  %s8 = ssub.s32 1, %s6
  %s9 = scalar_select 0, %s8, %s6
  %10 = sst [smem:[#allocation3]] %s0
  %s11 = sshll.u32 %s1, 4
  %s12 = int_to_ptr.vmem [resolvable:$true] %s11
  %14 = dma.vmem_to_smem %s12, 16, [#allocation4], [#allocation2]
  %15 = dma.done [#allocation2], 16
  %16 = sfence
  // Predicated region
  $region2: #{_create_conv_mask.1} parent=0 // pred_check
    _
  $region3: #{_create_conv_mask.1} parent=0 // pred_check_branch
    %18 = sbr.rel (0) target = $region5
  $region4: #{_create_conv_mask.1} parent=0 // pred_region
    _
  $region5: #{_create_conv_mask.1} parent=0 // pred_fallthru
    _
  %v21 = vlaneseq
  %v22 = vshrl.u32 %v21, 7
  %s23 = smul.u32 0, 8
  %v24 = vstv %s23
  %v25 = vadd.s32 %v22, %v24
  %v26 = vlaneseq
  %v27 = vand.u32 %v26, 127
  %s28 = smul.u32 0, 128
  %v29 = vstv %s28
  %v30 = vadd.s32 %v27, %v29
  %s31 = sld [smem:[#allocation3]]
  %v32 = vmul.u32 %v25, 2654435761
  %v33 = vmul.u32 %v30, 2246822519
  %v34 = vadd.s32 %v32, %v33
  %v35 = vstv %s31
  %v36 = vadd.s32 %v34, %v35
  %v37 = vshrl.u32 %v36, 16
  %v38 = vxor.u32 %v36, %v37
  %v39 = vmul.u32 %v38, 2146121005
  %v40 = vshrl.u32 %v39, 15
  %v41 = vxor.u32 %v39, %v40
  %v42 = vmul.u32 %v41, 2221713035
  %v43 = vshrl.u32 %v42, 16
  %v44 = vxor.u32 %v42, %v43
  %v45 = vshrl.u32 %v44, 8
  %v46 = vcvt.s32.f32 %v45
  %v47 = vmul.f32 %v46, 5.9604645e-08
  %s48 = sld [smem:[#allocation4]]
  %s49 = sld [smem:[#allocation4 + $0x1]]
  %s50 = smul.f32 %s49, 2.0
  %v51 = vstv %s50
  %v52 = vmul.f32 %v47, %v51
  %v53 = vstv %s49
  %v54 = vsub.f32 %v52, %v53
  %v55 = vld [vmem:[%s2] sm:$0xff]
  %v56 = vand.u32 2147483647, %v55
  %v57 = vstv %s48
  %vm58 = vcmp.ge.f32.partialorder %v56, %v57
  %v59 = vsel %vm58, %v55, %v54
  %60 = vst [vmem:[%s3] sm:$0xff] %v59
  %vm61 = vmpackc.low %vm58, %vm58
  %vm62 = vmpackc.even %vm61, %vm61
  %v63 = vsel %vm62, 16843009, 0
  %64 = vst [vmem:[%s4] sm:$0x3] %v63
  // Predicated region
  $region6: #{_create_conv_mask.1} parent=0 // pred_check
    _
  $region7: #{_create_conv_mask.1} parent=0 // pred_check_branch
    %66 = sbr.rel (0) target = $region9
  $region8: #{_create_conv_mask.1} parent=0 // pred_region
    _
  $region9: #{_create_conv_mask.1} parent=0 // pred_fallthru
    _
  // Predicated region
  $region10: #{_create_conv_mask.1} parent=0 // pred_check
    _
  $region11: #{_create_conv_mask.1} parent=0 // pred_check_branch
    %68 = sbr.rel (0) target = $region13
  $region12: #{_create_conv_mask.1} parent=0 // pred_region
    _
  $region13: #{_create_conv_mask.1} parent=0 // pred_fallthru
    _
  // Predicated region
  $region14: #{_create_conv_mask.1} parent=0 // pred_check
    _
  $region15: #{_create_conv_mask.1} parent=0 // pred_check_branch
    %70 = sbr.rel (0) target = $region17
  $region16: #{_create_conv_mask.1} parent=0 // pred_region
    _
  $region17: #{_create_conv_mask.1} parent=0 // pred_fallthru
    _
  // Predicated region
  $region18: #{_create_conv_mask.1} parent=0 // pred_check
    _
  $region19: #{_create_conv_mask.1} parent=0 // pred_check_branch
    %72 = sbr.rel (0) target = $region21
  $region20: #{_create_conv_mask.1} parent=0 // pred_region
    _
  $region21: #{_create_conv_mask.1} parent=0 // pred_fallthru
    _

</llo_original>
